<compile_context>
chip_gen: v7x
topology: tpu7x:2x2x1
jax: 0.10.0
libtpu: 0.0.40
codegen_flags: <defaults>
</compile_context>

<pallas_src>
import functools

import jax
import jax.numpy as jnp
from jax.experimental import pallas as pl
from jax.experimental.pallas import tpu as pltpu


def _rup(v, m):
    return -(-v // m) * m


# ---------------------------------------------------------------------------
# Kernel 1 (default, small/medium L): banded single-matmul formulation.
#   out[r, t*out_ch + o] = sum_{s,c} x_pad[r, s*C + c] * band[s*C+c, t*out_ch+o]
# ---------------------------------------------------------------------------
def _banded_kernel(x_ref, band_ref, b_ref, o_ref):
    """x_ref: (block_rows, Lp*C); band_ref: (Lp*C, L*out_ch);
    b_ref: (1, L*out_ch) f32; o_ref: (block_rows, L*out_ch)."""
    acc = jnp.dot(x_ref[...], band_ref[...],
                  preferred_element_type=jnp.float32)
    o_ref[...] = (acc + b_ref[...]).astype(o_ref.dtype)


# ---------------------------------------------------------------------------
# Kernel 2 (fallback, large L): per-tap accumulation with a fused weight slab.
# ---------------------------------------------------------------------------
def _per_tap_kernel(x_ref, w_ref, b_ref, o_ref, *, tap_positions, seq_len):
    """x_ref: (block_rows, Lp, C); w_ref: (n_taps, C, out_ch);
    b_ref: (1, out_ch) f32; o_ref: (block_rows*seq_len, out_ch)."""
    rblk, _, c_in = x_ref.shape
    out_ch = o_ref.shape[-1]
    m = rblk * seq_len
    acc = jnp.broadcast_to(b_ref[...], (m, out_ch)).astype(jnp.float32)
    for t, start in enumerate(tap_positions):
        xs = x_ref[:, pl.ds(start, seq_len), :]            # static slice
        acc = acc + jnp.dot(xs.reshape(m, c_in), w_ref[t],
                            preferred_element_type=jnp.float32)
    o_ref[...] = acc.astype(o_ref.dtype)


def dilated_inception(x, weights, biases, kernel_sizes, dilation, *,
                      block_rows=None, compute_dtype=None,
                      band_bytes_limit=6 * 1024 * 1024,
                      vmem_budget_bytes=8 * 1024 * 1024,
                      force_per_tap=False):
    """x: (B, C, N, L) NCHW.  weights[i]: (k_i, C, h_dim), biases[i]: (1,1,h_dim)."""
    B, C, N, L = x.shape
    n_k = len(kernel_sizes)
    h_dim = weights[0].shape[-1]
    out_ch = h_dim * n_k
    out_dtype = x.dtype
    cdt = compute_dtype if compute_dtype is not None else x.dtype
    itemsize = jnp.dtype(cdt).itemsize
    out_itemsize = jnp.dtype(out_dtype).itemsize

    # PyTorch padding='same': total = d*(k-1), left = total // 2.
    lefts = [dilation * (k - 1) // 2 for k in kernel_sizes]
    max_left = max(lefts)
    max_total = dilation * (max(kernel_sizes) - 1)
    max_right = max_total - max_left
    offsets = [max_left - l for l in lefts]

    # Fused weight slab: one (C, out_ch) matrix per distinct tap position in
    # the shared max-padded buffer, zero where a branch has no tap.
    positions = sorted({off + j * dilation
                        for off, k in zip(offsets, kernel_sizes)
                        for j in range(k)})
    pos_idx = {p: i for i, p in enumerate(positions)}
    w_all = jnp.zeros((len(positions), C, out_ch), cdt)
    for i, (k, off) in enumerate(zip(kernel_sizes, offsets)):
        for j in range(k):
            w_all = w_all.at[pos_idx[off + j * dilation], :,
                             i * h_dim:(i + 1) * h_dim].set(
                                 weights[i][j].astype(cdt))
    b_all = jnp.concatenate(
        [b.reshape(1, h_dim).astype(jnp.float32) for b in biases], axis=-1)

    # Glue: NCHW -> (rows, time, channels).
    R = B * N
    Lp = L + max_left + max_right
    x_rows = jnp.transpose(x, (0, 2, 3, 1)).reshape(R, L, C).astype(cdt)

    LK = Lp * C
    LO = L * out_ch
    band_bytes = LK * LO * itemsize
    use_banded = (not force_per_tap) and band_bytes <= band_bytes_limit

    if use_banded:
        # ----- banded single-matmul path -----
        if block_rows is None:
            per_row = (2 * _rup(LK, 128) * itemsize        # x (double-buffered)
                       + 2 * _rup(LO, 128) * out_itemsize) # out (double-buffered)
            budget = max(vmem_budget_bytes - 2 * band_bytes, 1 << 20)
            block_rows = max(8, int(budget // per_row) // 8 * 8)
            block_rows = min(block_rows, _rup(max(R // 2, 8), 8), _rup(R, 8))
        else:
            block_rows = _rup(block_rows, 8)
        R_pad = _rup(R, block_rows)

        x_pad = jnp.pad(x_rows, ((0, R_pad - R), (max_left, max_right), (0, 0)))
        x_flat = x_pad.reshape(R_pad, LK)

        # Block-banded weight: band[s*C+c, t*out_ch+o] = w_all[pos_idx[s-t]][c,o]
        # when (s - t) is a tap position, else 0.
        band = jnp.zeros((Lp, C, L, out_ch), cdt)
        t_idx = jnp.arange(L)
        for pi, p in enumerate(positions):
            band = band.at[t_idx + p, :, t_idx, :].set(w_all[pi])
        band = band.reshape(LK, LO)
        b_tiled = jnp.tile(b_all, (1, L))                  # (1, L*out_ch)

        out = pl.pallas_call(
            _banded_kernel,
            out_shape=jax.ShapeDtypeStruct((R_pad, LO), out_dtype),
            grid=(R_pad // block_rows,),
            in_specs=[
                pl.BlockSpec((block_rows, LK), lambda r: (r, 0)),
                pl.BlockSpec((LK, LO), lambda r: (0, 0)),
                pl.BlockSpec((1, LO), lambda r: (0, 0)),
            ],
            out_specs=pl.BlockSpec((block_rows, LO), lambda r: (r, 0)),
            compiler_params=pltpu.CompilerParams(
                dimension_semantics=("parallel",),
                vmem_limit_bytes=32 * 1024 * 1024),
        )(x_flat, band, b_tiled)

        out = out[:R].reshape(B, N, L, out_ch)
        return jnp.transpose(out, (0, 3, 1, 2))

    # ----- fallback: per-tap accumulation (arbitrarily long L) -----
    # TODO(synk): for very long L the band path could be recovered by tiling
    # the time axis with halo blocks instead of falling back to skinny-K taps.
    if block_rows is None:
        per_row = (2 * Lp * _rup(C, 128) * itemsize
                   + 2 * L * _rup(out_ch, 128) * out_itemsize
                   + L * _rup(out_ch, 128) * 4)            # f32 accumulator
        block_rows = max(8, int(vmem_budget_bytes // per_row) // 8 * 8)
        block_rows = min(block_rows, _rup(max(R // 2, 8), 8), _rup(R, 8))
    else:
        block_rows = _rup(block_rows, 8)
    R_pad = _rup(R, block_rows)
    x_pad = jnp.pad(x_rows, ((0, R_pad - R), (max_left, max_right), (0, 0)))

    kernel = functools.partial(_per_tap_kernel,
                               tap_positions=tuple(positions), seq_len=L)
    out = pl.pallas_call(
        kernel,
        out_shape=jax.ShapeDtypeStruct((R_pad * L, out_ch), out_dtype),
        grid=(R_pad // block_rows,),
        in_specs=[
            pl.BlockSpec((block_rows, Lp, C), lambda r: (r, 0, 0)),
            pl.BlockSpec(w_all.shape, lambda r: (0, 0, 0)),
            pl.BlockSpec(b_all.shape, lambda r: (0, 0)),
        ],
        out_specs=pl.BlockSpec((block_rows * L, out_ch), lambda r: (r, 0)),
        compiler_params=pltpu.CompilerParams(
            dimension_semantics=("parallel",),
            vmem_limit_bytes=32 * 1024 * 1024),
    )(x_pad, w_all, b_all)

    out = out.reshape(R_pad, L, out_ch)[:R].reshape(B, N, L, out_ch)
    return jnp.transpose(out, (0, 3, 1, 2))


def reference(x, weights, biases, kernel_sizes, dilation):
    """Pure-JAX reference with identical PyTorch 'same' conv semantics."""
    B, C, N, L = x.shape
    outs = []
    for w, b, k in zip(weights, biases, kernel_sizes):
        total = dilation * (k - 1)
        left = total // 2
        right = total - left
        xp = jnp.pad(x, ((0, 0), (0, 0), (0, 0), (left, right)))
        acc = jnp.zeros((B, w.shape[-1], N, L), jnp.float32)
        for j in range(k):
            xs = jax.lax.dynamic_slice_in_dim(xp, j * dilation, L, axis=3)
            acc = acc + jnp.einsum('bcnl,cd->bdnl', xs, w[j])
        acc = acc + b.reshape(1, -1, 1, 1)
        outs.append(acc.astype(x.dtype))
    return jnp.concatenate(outs, axis=1)


if __name__ == "__main__":
    B, C_in, N, L = 2, 4, 16, 16
    out_channels = 8
    kernel_sizes = [2, 3, 6, 7]
    dilation = 2
    h_dim = out_channels // len(kernel_sizes)

    key = jax.random.PRNGKey(0)
    kx, *kws = jax.random.split(key, 1 + 2 * len(kernel_sizes))
    x = jax.random.normal(kx, (B, C_in, N, L), jnp.float32)

    # Deterministic synthetic parameters (PyTorch weight (h,C,1,k) -> (k,C,h)).
    weights, biases = [], []
    for i, k in enumerate(kernel_sizes):
        weights.append(0.1 * jax.random.normal(kws[2 * i],
                                               (k, C_in, h_dim), jnp.float32))
        biases.append(0.1 * jax.random.normal(kws[2 * i + 1],
                                              (1, 1, h_dim), jnp.float32))

    ref = reference(x, weights, biases, kernel_sizes, dilation)

    # Default (banded single-matmul) path.
    out = dilated_inception(x, weights, biases, kernel_sizes, dilation)
    out = jax.block_until_ready(out)
    assert out.shape == (B, out_channels, N, L)
    assert out.dtype == x.dtype
    assert jnp.allclose(out, ref, atol=1e-4, rtol=1e-4)

    # Fallback (per-tap accumulation) path, exercised for coverage.
    out2 = dilated_inception(x, weights, biases, kernel_sizes, dilation,
                             force_per_tap=True)
    out2 = jax.block_until_ready(out2)
    assert jnp.allclose(out2, ref, atol=1e-4, rtol=1e-4)

    print("KERNEL_OK")
</pallas_src>

<mosaic_0001>
module attributes {stable_mosaic.version = 11 : i64} {
  func.func @_banded_kernel(%arg0: i32, %arg1: memref<16x112xf32, #tpu.memory_space<vmem>>, %arg2: memref<112x128xf32, #tpu.memory_space<vmem>>, %arg3: memref<1x128xf32, #tpu.memory_space<vmem>>, %arg4: memref<16x128xf32, #tpu.memory_space<vmem>>) attributes {dimension_semantics = [#tpu.dimension_semantics<parallel>], iteration_bounds = array<i64: 2>, scalar_prefetch = 0 : i64, scratch_operands = 0 : i64, tpu.core_type = #tpu.core_type<tc>, window_params = [{transform_indices = @transform_0, window_bounds = array<i64: 16, 112>}, {pipeline_mode = #tpu.pipeline_mode<synchronous>, transform_indices = @transform_1, window_bounds = array<i64: 112, 128>}, {pipeline_mode = #tpu.pipeline_mode<synchronous>, transform_indices = @transform_2, window_bounds = array<i64: 1, 128>}, {transform_indices = @transform_3, window_bounds = array<i64: 16, 128>}]} {
    %c0 = arith.constant 0 : index
    %c0_0 = arith.constant 0 : index
    %0 = vector.load %arg1[%c0, %c0_0] : memref<16x112xf32, #tpu.memory_space<vmem>>, vector<16x112xf32>
    %c0_1 = arith.constant 0 : index
    %c0_2 = arith.constant 0 : index
    %1 = vector.load %arg2[%c0_1, %c0_2] : memref<112x128xf32, #tpu.memory_space<vmem>>, vector<112x128xf32>
    %cst = arith.constant dense<0.000000e+00> : vector<16x128xf32>
    %2 = tpu.matmul %0, %1, %cst {dimension_numbers = #tpu.dot_dimension_numbers<[1], [0], [0], [1], [0, 0, 1, 1], [], []>} : vector<16x112xf32>, vector<112x128xf32>, vector<16x128xf32> -> vector<16x128xf32>
    %c0_3 = arith.constant 0 : index
    %c0_4 = arith.constant 0 : index
    %3 = vector.load %arg3[%c0_3, %c0_4] : memref<1x128xf32, #tpu.memory_space<vmem>>, vector<1x128xf32>
    %4 = vector.broadcast %3 : vector<1x128xf32> to vector<16x128xf32>
    %5 = arith.addf %2, %4 : vector<16x128xf32>
    %c0_5 = arith.constant 0 : index
    %c0_6 = arith.constant 0 : index
    %6 = vector.load %arg4[%c0_5, %c0_6] : memref<16x128xf32, #tpu.memory_space<vmem>>, vector<16x128xf32>
    tpu.vector_store %arg4[%c0_5, %c0_6], %5 {strides = array<i32>} : memref<16x128xf32, #tpu.memory_space<vmem>>, vector<16x128xf32>,
    return
  }
  func.func @transform_0(%arg0: i32) -> (i32, i32) {
    %c0_i32 = arith.constant 0 : i32
    %c0_i32_0 = arith.constant 0 : i32
    return %arg0, %c0_i32 : i32, i32
  }
  func.func @transform_1(%arg0: i32) -> (i32, i32) {
    %c0_i32 = arith.constant 0 : i32
    %c0_i32_0 = arith.constant 0 : i32
    %c0_i32_1 = arith.constant 0 : i32
    return %c0_i32, %c0_i32_0 : i32, i32
  }
  func.func @transform_2(%arg0: i32) -> (i32, i32) {
    %c0_i32 = arith.constant 0 : i32
    %c0_i32_0 = arith.constant 0 : i32
    %c0_i32_1 = arith.constant 0 : i32
    return %c0_i32, %c0_i32_0 : i32, i32
  }
  func.func @transform_3(%arg0: i32) -> (i32, i32) {
    %c0_i32 = arith.constant 0 : i32
    %c0_i32_0 = arith.constant 0 : i32
    return %arg0, %c0_i32 : i32, i32
  }
}

</mosaic_0001>

<llo_original>
// kernel: tpu_custom_call.1
$region0: #{tpu_custom_call.1}
  #allocation0 [shape = 'u32[]', space=smem, size = 0x4, offset = 0x4, fixed_abs, tag = 'smem constant byte address 0x4 - core index']
  #allocation1 [shape = 'u32[144,128]{1,0:T(1,128)}', space=vmem, size = 0x12000, scoped, tag = 'internal scratch']
  %s0 = inlined_call_operand.hbm [shape: f32[32,112], index: 0, kind: input, shape index: {}]
  %s1 = inlined_call_operand.hbm [shape: f32[112,128], index: 1, kind: input, shape index: {}]
  %s2 = inlined_call_operand.vmem [shape: f32[1,128], index: 2, kind: input, shape index: {}]
  %s3 = inlined_call_operand.hbm [shape: f32[32,128], index: 3, kind: output, shape index: {}]
  %s4 = sld [smem:[#allocation0]]
  $region53: #{tpu_custom_call.1} parent=0
    _
  %s6 = ssub.s32 1, %s4
  %s7 = scalar_select 0, %s6, %s4
  $region1: #{tpu_custom_call.1} parent=0
    #allocation2 [shape = 'u8[16384]{0}', space=vmem, size = 0x4000, scoped, tag = 'input window, operand 0']
    #allocation3 [shape = 's32[2]{0}', space=sflag, size = 0x8, scoped, tag = 'scoped memory for tpu_custom_call.1']
    #allocation4 [shape = 's32[2]{0}', space=sflag, size = 0x8, scoped, tag = 'scoped memory for tpu_custom_call.1']
    #allocation5 [shape = 'u8[57344]{0}', space=vmem, size = 0xe000, scoped, tag = 'input window, operand 1, single buffered']
    #allocation6 [shape = 's32[1]{0}', space=sflag, size = 0x4, scoped, tag = 'scoped memory for tpu_custom_call.1']
    #allocation7 [shape = 'u8[16384]{0}', space=vmem, size = 0x4000, scoped, tag = 'output window, operand 0']
    %8 = vsyncpa [#allocation3], 0
    %s9 = scalar_lea.sflag [#allocation3], 1
    %10 = vsyncpa %s9, 0
    %11 = vsyncpa [#allocation6], 0
    %12 = vsyncpa [#allocation4], 0
    %s13 = scalar_lea.sflag [#allocation4], 1
    %14 = vsyncpa %s13, 0
    loop: start=0, step=1, limit=4
    $region2: #{tpu_custom_call.1} parent=1 // loop_pre_header
      _
    $region3: #{tpu_custom_call.1} parent=1 // loop_header
      %s16 = sphi 0, %s20
      %p17 = scmp.ge.s32.totalorder %s16, 4
      %s26 = sphi 0, %s28
      %s29 = sphi 0, %s26
      %s30 = sphi 0, %s29
      %s46 = sphi 0, %s30
      %s50 = sphi 0, %s50
      %s52 = sphi 0, %s50
      %s53 = sphi 0, %s52
      %s67 = sphi 0, %s53
      %s71 = sphi 0, %s71
      %s73 = sphi 0, %s71
      %s74 = sphi 0, %s73
      %s88 = sphi 0, %s74
      %s94 = sphi 0, %s96
      %s97 = sphi 0, %s94
      %s98 = sphi 0, %s97
      %s114 = sphi 0, %s98
    $region4: #{tpu_custom_call.1} parent=1 // loop_header_branch
      %19 = sbr.rel (%p17) target = $region8
    $region5: #{tpu_custom_call.1} parent=1 // loop_body
      %s21 = ssub.s32 %s16, 1
      %s22 = ssub.s32 %s16, 2
      %s23 = sadd.s32 %s16, 1
      %s24 = ssub.s32 %s16, %s23
      %p25 = scmp.eq.s32.totalorder %s24, 0
      %s27 = sadd.s32 %s26, 1
      %s28 = scalar_select %p25, %s26, %s27
      %p31 = pneg %p25
      %p32 = scmp.eq.s32.totalorder %s16, 1
      %p33 = por %p31, %p32
      %p34 = scmp.ne.s32.totalorder %s26, %s29
      %p35 = scmp.eq.s32.totalorder %s16, 0
      %p36 = por %p34, %p35
      %p37 = scmp.ne.s32.totalorder %s26, %s29
      %p38 = scmp.eq.s32.totalorder %s21, 1
      %p39 = por %p37, %p38
      %p40 = scmp.ne.s32.totalorder %s29, %s30
      %p41 = scmp.eq.s32.totalorder %s21, 0
      %p42 = por %p40, %p41
      %p43 = scmp.ne.s32.totalorder %s29, %s30
      %p44 = scmp.eq.s32.totalorder %s22, 1
      %p45 = por %p43, %p44
      %p47 = scmp.ne.s32.totalorder %s30, %s46
      %p48 = scmp.eq.s32.totalorder %s22, 0
      %p49 = por %p47, %p48
      %s51 = sadd.s32 %s50, 1
      %p54 = scmp.eq.s32.totalorder %s16, 1
      %p55 = scmp.ne.s32.totalorder %s50, %s52
      %p56 = scmp.eq.s32.totalorder %s16, 0
      %p57 = por %p55, %p56
      %p58 = scmp.ne.s32.totalorder %s50, %s52
      %p59 = scmp.eq.s32.totalorder %s21, 1
      %p60 = por %p58, %p59
      %p61 = scmp.ne.s32.totalorder %s52, %s53
      %p62 = scmp.eq.s32.totalorder %s21, 0
      %p63 = por %p61, %p62
      %p64 = scmp.ne.s32.totalorder %s52, %s53
      %p65 = scmp.eq.s32.totalorder %s22, 1
      %p66 = por %p64, %p65
      %p68 = scmp.ne.s32.totalorder %s53, %s67
      %p69 = scmp.eq.s32.totalorder %s22, 0
      %p70 = por %p68, %p69
      %s72 = sadd.s32 %s71, 1
      %p75 = scmp.eq.s32.totalorder %s16, 1
      %p76 = scmp.ne.s32.totalorder %s71, %s73
      %p77 = scmp.eq.s32.totalorder %s16, 0
      %p78 = por %p76, %p77
      %p79 = scmp.ne.s32.totalorder %s71, %s73
      %p80 = scmp.eq.s32.totalorder %s21, 1
      %p81 = por %p79, %p80
      %p82 = scmp.ne.s32.totalorder %s73, %s74
      %p83 = scmp.eq.s32.totalorder %s21, 0
      %p84 = por %p82, %p83
      %p85 = scmp.ne.s32.totalorder %s73, %s74
      %p86 = scmp.eq.s32.totalorder %s22, 1
      %p87 = por %p85, %p86
      %p89 = scmp.ne.s32.totalorder %s74, %s88
      %p90 = scmp.eq.s32.totalorder %s22, 0
      %p91 = por %p89, %p90
      %s92 = ssub.s32 %s16, %s23
      %p93 = scmp.eq.s32.totalorder %s92, 0
      %s95 = sadd.s32 %s94, 1
      %s96 = scalar_select %p93, %s94, %s95
      %p99 = pneg %p93
      %p100 = scmp.eq.s32.totalorder %s16, 1
      %p101 = por %p99, %p100
      %p102 = scmp.ne.s32.totalorder %s94, %s97
      %p103 = scmp.eq.s32.totalorder %s16, 0
      %p104 = por %p102, %p103
      %p105 = scmp.ne.s32.totalorder %s94, %s97
      %p106 = scmp.eq.s32.totalorder %s21, 1
      %p107 = por %p105, %p106
      %p108 = scmp.ne.s32.totalorder %s97, %s98
      %p109 = scmp.eq.s32.totalorder %s21, 0
      %p110 = por %p108, %p109
      %p111 = scmp.ne.s32.totalorder %s97, %s98
      %p112 = scmp.eq.s32.totalorder %s22, 1
      %p113 = por %p111, %p112
      %p115 = scmp.ne.s32.totalorder %s98, %s114
      %p116 = scmp.eq.s32.totalorder %s22, 0
      %p117 = por %p115, %p116
      %p118 = scmp.le.s32.totalorder 1, %s16
      %p119 = scmp.lt.s32.totalorder %s16, 3
      %p120 = pnand %p118, %p119
      %p121 = pneg %p120
      // Predicated region
      $region9: #{tpu_custom_call.1} parent=5 // pred_check
        _
      $region10: #{tpu_custom_call.1} parent=5 // pred_check_branch
        %123 = sbr.rel (%p120) target = $region12
      $region11: #{tpu_custom_call.1} parent=5 // pred_region
        %s124 = ssub.s32 %s16, 1
        // Predicated region
        $region13: #{tpu_custom_call.1} parent=11 // pred_check
          %p125 = pneg %p63
        $region14: #{tpu_custom_call.1} parent=11 // pred_check_branch
          %127 = sbr.rel (%p125) target = $region16
        $region15: #{tpu_custom_call.1} parent=11 // pred_region
          %s129 = ssub.s32 1792, 1792
          %130 = vsyncadd [#allocation6], %s129
          %s131 = sshll.u32 [#allocation5], 4
          %s132 = int_to_ptr.vmem [resolvable:$true] %s131
          %137 = dma.hbm_to_vmem [thread:$0]  %s1, 1792, %s132, [#allocation6], 128, 128, 8
        $region16: #{tpu_custom_call.1} parent=11 // pred_fallthru
          _
        // Predicated region
        $region17: #{tpu_custom_call.1} parent=11 // pred_check
          %p138 = pneg %p84
        $region18: #{tpu_custom_call.1} parent=11 // pred_check_branch
          %140 = sbr.rel (%p138) target = $region20
        $region19: #{tpu_custom_call.1} parent=11 // pred_region
          _
        $region20: #{tpu_custom_call.1} parent=11 // pred_fallthru
          _
      $region12: #{tpu_custom_call.1} parent=5 // pred_fallthru
        _
      %p141 = scmp.lt.s32.totalorder %s16, 2
      // Predicated region
      $region21: #{tpu_custom_call.1} parent=5 // pred_check
        %p142 = pneg %p141
      $region22: #{tpu_custom_call.1} parent=5 // pred_check_branch
        %144 = sbr.rel (%p142) target = $region24
      $region23: #{tpu_custom_call.1} parent=5 // pred_region
        // Predicated region
        $region25: #{tpu_custom_call.1} parent=23 // pred_check
          %p145 = pneg %p36
        $region26: #{tpu_custom_call.1} parent=23 // pred_check_branch
          %147 = sbr.rel (%p145) target = $region28
        $region27: #{tpu_custom_call.1} parent=23 // pred_region
          %s148 = sand.u32 %s26, 1
          %s149 = scalar_lea.sflag [#allocation3], %s148
          %s150 = sand.u32 %s26, 1
          %s151 = smul.addr %s150, 16
          %s152 = scalar_lea.vmem [#allocation2], %s151
          %s153 = smul.u32 2, %s16
          %s155 = ssub.s32 256, 256
          %156 = vsyncadd %s149, %s155
          %s157 = smul.addr %s153, 128
          %s158 = scalar_lea.hbm %s0, %s157
          %s159 = sshll.u32 %s152, 4
          %s160 = int_to_ptr.vmem [resolvable:$true] %s159
          %165 = dma.hbm_to_vmem [thread:$0]  %s158, 256, %s160, %s149, 128, 128, 8
        $region28: #{tpu_custom_call.1} parent=23 // pred_fallthru
          _
      $region24: #{tpu_custom_call.1} parent=5 // pred_fallthru
        _
      %p166 = scmp.le.s32.totalorder 1, %s16
      %p167 = scmp.lt.s32.totalorder %s16, 3
      %p168 = pnand %p166, %p167
      %p169 = pneg %p168
      // Predicated region
      $region29: #{tpu_custom_call.1} parent=5 // pred_check
        _
      $region30: #{tpu_custom_call.1} parent=5 // pred_check_branch
        %171 = sbr.rel (%p168) target = $region32
      $region31: #{tpu_custom_call.1} parent=5 // pred_region
        %s172 = ssub.s32 %s16, 1
        %s173 = sand.u32 %s29, 1
        %s174 = scalar_lea.sflag [#allocation3], %s173
        %s175 = sand.u32 %s29, 1
        %s176 = smul.addr %s175, 16
        %s177 = scalar_lea.vmem [#allocation2], %s176
        // Predicated region
        $region33: #{tpu_custom_call.1} parent=31 // pred_check
          %p178 = pneg %p42
        $region34: #{tpu_custom_call.1} parent=31 // pred_check_branch
          %180 = sbr.rel (%p178) target = $region36
        $region35: #{tpu_custom_call.1} parent=31 // pred_region
          %181 = dma.done %s174, 256
        $region36: #{tpu_custom_call.1} parent=31 // pred_fallthru
          _
        // Predicated region
        $region37: #{tpu_custom_call.1} parent=31 // pred_check
          %p182 = pneg %p63
        $region38: #{tpu_custom_call.1} parent=31 // pred_check_branch
          %184 = sbr.rel (%p182) target = $region40
        $region39: #{tpu_custom_call.1} parent=31 // pred_region
          %185 = dma.done [#allocation6], 1792
        $region40: #{tpu_custom_call.1} parent=31 // pred_fallthru
          _
        %s186 = sand.u32 %s29, 1
        %s187 = scalar_lea.sflag [#allocation3], %s186
        %s188 = sand.u32 %s29, 1
        %s189 = smul.addr %s188, 16
        %s190 = scalar_lea.vmem [#allocation2], %s189
        %p191 = pneg %p42
        %p192 = pneg %p39
        %p193 = pneg %p63
        %p194 = pneg %p60
        %p195 = pneg %p84
        %p196 = pneg %p81
        %p197 = pneg %p110
        %p198 = pneg %p107
        %s199 = sand.u32 %s97, 1
        %s200 = scalar_lea.sflag [#allocation4], %s199
        %s201 = sand.u32 %s97, 1
        %s202 = smul.addr %s201, 16
        %s203 = scalar_lea.vmem [#allocation7], %s202
        %s204 = smul.u32 2, %s21
        %s205 = smul.u32 2, %s21
        %v206 = vld [vmem:[%s177] sm:$0xff]
        %v207 = vld [vmem:[%s177 + $0x8] sm:$0xff]
        %v208 = vld [vmem:[#allocation5] sm:$0xff]
        %v209 = vld [vmem:[#allocation5 + $0x8] sm:$0xff]
        %v210 = vld [vmem:[#allocation5 + $0x10] sm:$0xff]
        %v211 = vld [vmem:[#allocation5 + $0x18] sm:$0xff]
        %v212 = vld [vmem:[#allocation5 + $0x20] sm:$0xff]
        %v213 = vld [vmem:[#allocation5 + $0x28] sm:$0xff]
        %v214 = vld [vmem:[#allocation5 + $0x30] sm:$0xff]
        %v215 = vld [vmem:[#allocation5 + $0x38] sm:$0xff]
        %v216 = vld [vmem:[#allocation5 + $0x40] sm:$0xff]
        %v217 = vld [vmem:[#allocation5 + $0x48] sm:$0xff]
        %v218 = vld [vmem:[#allocation5 + $0x50] sm:$0xff]
        %v219 = vld [vmem:[#allocation5 + $0x58] sm:$0xff]
        %v220 = vld [vmem:[#allocation5 + $0x60] sm:$0xff]
        %v221 = vld [vmem:[#allocation5 + $0x68] sm:$0xff]
        %v222 = vld [vmem:[%s2] sm:$0x1]
        %v224 = vlaneseq
        %v225 = vshrl.u32 %v224, 7
        %v226 = vsub.s32 0, %v225
        %v227 = vrot.slane %v222, %v226
        %vm229 = vcmask 916480
        %v231 = vsel %vm229, %v206, 0
        %v234 = vsel %vm229, %v207, 0
        %236 = vmatprep.subr.mxu0 0.0
        %237 = vmatpush1.msra.mxu0 %v208
        %238 = vmatprep.subr.mxu0 0.0
        %239 = vmatpush1.msra.mxu0 %v209
        %240 = vmatprep.subr.mxu0 0.0
        %241 = vmatpush1.msra.mxu0 %v210
        %242 = vmatprep.subr.mxu0 0.0
        %243 = vmatpush1.msra.mxu0 %v211
        %244 = vmatprep.subr.mxu0 0.0
        %245 = vmatpush1.msra.mxu0 %v212
        %246 = vmatprep.subr.mxu0 0.0
        %247 = vmatpush1.msra.mxu0 %v213
        %248 = vmatprep.subr.mxu0 0.0
        %249 = vmatpush1.msra.mxu0 %v214
        %250 = vmatprep.subr.mxu0 0.0
        %251 = vmatpush1.msra.mxu0 %v215
        %252 = vmatprep.subr.mxu0 0.0
        %253 = vmatpush1.msra.mxu0 %v216
        %254 = vmatprep.subr.mxu0 0.0
        %255 = vmatpush1.msra.mxu0 %v217
        %256 = vmatprep.subr.mxu0 0.0
        %257 = vmatpush1.msra.mxu0 %v218
        %258 = vmatprep.subr.mxu0 0.0
        %259 = vmatpush1.msra.mxu0 %v219
        %260 = vmatprep.subr.mxu0 0.0
        %261 = vmatpush1.msra.mxu0 %v220
        %262 = vmatprep.subr.mxu0 0.0
        %263 = vmatpush1.msra.mxu0 %v221
        %264 = vmatprep.subr.mxu0 0.0
        %265 = vmatpush1.msra.mxu0 0.0
        %266 = vmatprep.subr.mxu0 0.0
        %267 = vmatpush1.msra.mxu0 0.0
        %268 = vmatprep.subr.mxu0 0.0
        %269 = vmatpush1.msra.mxu0 0.0
        %270 = vmatprep.subr.mxu0 0.0
        %271 = vmatpush1.msra.mxu0 0.0
        %272 = vmatprep.subr.mxu0 0.0
        %273 = vmatpush1.msra.mxu0 0.0
        %274 = vmatprep.subr.mxu0 0.0
        %275 = vmatpush1.msra.mxu0 0.0
        %276 = vmatprep.subr.mxu0 0.0
        %277 = vmatpush1.msra.mxu0 0.0
        %278 = vmatprep.subr.mxu0 0.0
        %279 = vmatpush1.msra.mxu0 0.0
        %280 = vmatprep.subr.mxu0 0.0
        %281 = vmatpush1.msra.mxu0 0.0
        %282 = vmatprep.subr.mxu0 0.0
        %283 = vmatpush1.msra.mxu0 0.0
        %284 = vmatprep.subr.mxu0 0.0
        %285 = vmatpush1.msra.mxu0 0.0
        %286 = vmatprep.subr.mxu0 0.0
        %287 = vmatpush1.msra.mxu0 0.0
        %288 = vmatprep.subr.mxu0 0.0
        %289 = vmatpush1.msra.mxu0 0.0
        %290 = vmatprep.subr.mxu0 0.0
        %291 = vmatpush1.msra.mxu0 0.0
        %292 = vmatprep.subr.mxu0 0.0
        %293 = vmatpush1.msra.mxu0 0.0
        %294 = vmatprep.subr.mxu0 0.0
        %295 = vmatpush1.msra.mxu0 0.0
        %296 = vmatprep.subr.mxu0 0.0
        %297 = vmatpush1.msra.mxu0 0.0
        %298 = vmatprep.subr.mxu0 0.0
        %299 = vmatpush1.msra.mxu0 0.0
        %300 = vmatprep.mubr.f32.mxu0 0.0
        %301 = vmatmul.mubr.f32.gmra.mrb[0].mxu0 %v231
        %v302 = vpop.f32.mrb[0].mxu0
        %v303 = vadd.f32 %v227, %v302
        %v304 = vpop.f32.mrb[0].mxu0
        %305 = vmatprep.mubr.f32.mxu0 0.0
        %306 = vmatmul.mubr.f32.gmra.mrb[0].mxu0 %v234
        %v307 = vpop.f32.mrb[0].mxu0
        %v308 = vadd.f32 %v227, %v307
        %v309 = vpop.f32.mrb[0].mxu0
        %310 = vdwg.mxu0
        %311 = vst [vmem:[%s203] sm:$0xff] %v303
        %312 = vst [vmem:[%s203 + $0x8] sm:$0xff] %v308
        %s313 = sand.u32 %s97, 1
        %s314 = scalar_lea.sflag [#allocation4], %s313
        %s315 = sand.u32 %s97, 1
        %s316 = smul.addr %s315, 16
        %s317 = scalar_lea.vmem [#allocation7], %s316
        // Predicated region
        $region41: #{tpu_custom_call.1} parent=31 // pred_check
          %p318 = pneg %p107
        $region42: #{tpu_custom_call.1} parent=31 // pred_check_branch
          %320 = sbr.rel (%p318) target = $region44
        $region43: #{tpu_custom_call.1} parent=31 // pred_region
          %s321 = smul.u32 2, %s21
          %s323 = ssub.s32 256, 256
          %324 = vsyncadd %s314, %s323
          %s325 = smul.addr %s321, 128
          %s326 = scalar_lea.hbm %s3, %s325
          %s327 = sshll.u32 %s317, 4
          %s328 = int_to_ptr.vmem [resolvable:$true] %s327
          %333 = dma.vmem_to_hbm [thread:$0]  %s328, 256, %s326, %s314, 128, 128, 8
        $region44: #{tpu_custom_call.1} parent=31 // pred_fallthru
          _
      $region32: #{tpu_custom_call.1} parent=5 // pred_fallthru
        _
      %p334 = scmp.le.s32.totalorder 2, %s16
      // Predicated region
      $region45: #{tpu_custom_call.1} parent=5 // pred_check
        %p335 = pneg %p334
      $region46: #{tpu_custom_call.1} parent=5 // pred_check_branch
        %337 = sbr.rel (%p335) target = $region48
      $region47: #{tpu_custom_call.1} parent=5 // pred_region
        %s338 = ssub.s32 %s16, 2
        // Predicated region
        $region49: #{tpu_custom_call.1} parent=47 // pred_check
          %p339 = pneg %p113
        $region50: #{tpu_custom_call.1} parent=47 // pred_check_branch
          %341 = sbr.rel (%p339) target = $region52
        $region51: #{tpu_custom_call.1} parent=47 // pred_region
          %s342 = sand.u32 %s98, 1
          %s343 = scalar_lea.sflag [#allocation4], %s342
          %s344 = sand.u32 %s98, 1
          %s345 = smul.addr %s344, 16
          %s346 = scalar_lea.vmem [#allocation7], %s345
          %347 = dma.done %s343, 256
        $region52: #{tpu_custom_call.1} parent=47 // pred_fallthru
          _
      $region48: #{tpu_custom_call.1} parent=5 // pred_fallthru
        _
    $region6: #{tpu_custom_call.1} parent=1 // loop_footer
      %s20 = sadd.s32 1, %s16
    $region7: #{tpu_custom_call.1} parent=1 // loop_footer_branch
      %15 = sbr.rel target = $region3
    $region8: #{tpu_custom_call.1} parent=1 // loop_exit
      _
    %348 = vsyncpa [#allocation3], 1
    %s349 = scalar_lea.sflag [#allocation3], 1
    %350 = vsyncpa %s349, 1
    %351 = vsyncpa [#allocation6], 1
    %352 = vsyncpa [#allocation4], 1
    %s353 = scalar_lea.sflag [#allocation4], 1
    %354 = vsyncpa %s353, 1

</llo_original>
